<compile_context>
chip_gen: v7x
topology: tpu7x:2x2x1
jax: 0.10.0
libtpu: 0.0.40
codegen_flags: <defaults>
</compile_context>

<pallas_src>
import jax
import jax.numpy as jnp
from jax.experimental import pallas as pl
from jax.experimental.pallas import tpu as pltpu


# Only chunk the copy when the tensor is big enough that multiple in-flight
# DMA descriptors matter (v7x HBM saturation); below this a single DMA wins.
_CHUNK_THRESHOLD_BYTES = 32 * 1024 * 1024
_MAX_CHUNKS = 8


def _pick_num_chunks(shape, nbytes):
    """Largest K in {8,4,2,1} dividing the leading dim, if the copy is large."""
    if nbytes < _CHUNK_THRESHOLD_BYTES or len(shape) == 0:
        return 1
    lead = shape[0]
    for k in (_MAX_CHUNKS, 4, 2):
        if lead % k == 0 and lead >= k:
            return k
    return 1


def _make_select_copy_kernel(num_chunks, chunk_rows):
    """HBM -> HBM copy: issue all chunk DMAs, then wait on all of them."""

    def kernel(x_hbm, o_hbm, sems):
        copies = []
        for c in range(num_chunks):  # static Python loop: traced once
            row0 = c * chunk_rows
            cp = pltpu.make_async_copy(
                x_hbm.at[pl.ds(row0, chunk_rows)],
                o_hbm.at[pl.ds(row0, chunk_rows)],
                sems.at[c],
            )
            cp.start()
            copies.append(cp)
        for cp in copies:
            cp.wait()

    return kernel


def rnn_select(inputs):
    """RNNSelect.forward — production path.

    Pure tuple selection: zero FLOPs, zero bytes moved, zero launch overhead.
    """
    return inputs[0]


def rnn_select_materialize(inputs):
    """RNNSelect.forward that materializes a fresh output buffer.

    Only use this if a caller contractually needs a new buffer (otherwise use
    `rnn_select`). Minimum-cost Pallas form: HBM->HBM DMA(s), no VMEM staging,
    no grid, zero-FLOP cost estimate for the XLA scheduler.
    """
    x = inputs[0]
    nbytes = x.size * x.dtype.itemsize

    num_chunks = _pick_num_chunks(x.shape, nbytes)
    chunk_rows = (x.shape[0] // num_chunks) if x.ndim > 0 else 1

    kernel = _make_select_copy_kernel(num_chunks, chunk_rows)

    out = pl.pallas_call(
        kernel,
        out_shape=jax.ShapeDtypeStruct(x.shape, x.dtype),
        # Both operands stay in HBM; the kernel drives the DMA explicitly.
        in_specs=[pl.BlockSpec(memory_space=pl.ANY)],
        out_specs=pl.BlockSpec(memory_space=pl.ANY),
        scratch_shapes=[pltpu.SemaphoreType.DMA((num_chunks,))],
        # Pure-memory op: tell XLA so it can overlap with neighboring compute.
        cost_estimate=pl.CostEstimate(
            flops=0,
            transcendentals=0,
            bytes_accessed=2 * nbytes,  # one HBM read + one HBM write
        ),
    )(x)
    return out


if __name__ == "__main__":
    key = jax.random.PRNGKey(0)
    k0, k1 = jax.random.split(key)

    # Small shapes consistent with a GRU forward:
    #   output (B, T, H), hidden (num_layers=1, B, H)
    B, T, H = 2, 8, 32
    gru_output = jax.random.normal(k0, (B, T, H), dtype=jnp.float32)
    gru_hidden = jax.random.normal(k1, (1, B, H), dtype=jnp.float32)

    inputs = (gru_output, gru_hidden)

    # Production (zero-cost) path: pure tuple selection.
    fast = rnn_select(inputs)
    assert fast is gru_output

    # Materializing Pallas path (fresh buffer via HBM->HBM DMA).
    result = rnn_select_materialize(inputs)
    result = jax.block_until_ready(result)

    assert result.shape == gru_output.shape
    assert result.dtype == gru_output.dtype
    assert bool(jnp.allclose(result, gru_output)), "RNNSelect output mismatch"

    print("KERNEL_OK")
</pallas_src>

<mosaic_0001>
module attributes {stable_mosaic.version = 11 : i64} {
  func.func @kernel(%arg0: memref<2x8x32xf32, #tpu.memory_space<any>>, %arg1: memref<2x8x32xf32, #tpu.memory_space<any>>, %arg2: memref<1x!tpu.dma_semaphore, #tpu.memory_space<semaphore_mem>>) attributes {dimension_semantics = [], scalar_prefetch = 0 : i64, scratch_operands = 1 : i64, tpu.core_type = #tpu.core_type<tc>} {
    %c0_i32 = arith.constant 0 : i32
    %c0_i32_0 = arith.constant 0 : i32
    %c0_i32_1 = arith.constant 0 : i32
    %c0_i32_2 = arith.constant 0 : i32
    %0 = tpu.memref_slice %arg0[%c0_i32_0, %c0_i32_1, %c0_i32_2] : memref<2x8x32xf32, #tpu.memory_space<any>> -> memref<2x8x32xf32, #tpu.memory_space<any>>
    %c0_i32_3 = arith.constant 0 : i32
    %c0_i32_4 = arith.constant 0 : i32
    %c0_i32_5 = arith.constant 0 : i32
    %1 = tpu.memref_slice %arg1[%c0_i32_3, %c0_i32_4, %c0_i32_5] : memref<2x8x32xf32, #tpu.memory_space<any>> -> memref<2x8x32xf32, #tpu.memory_space<any>>
    %2 = tpu.memref_slice %arg2[%c0_i32] : memref<1x!tpu.dma_semaphore, #tpu.memory_space<semaphore_mem>> -> memref<1x!tpu.dma_semaphore, #tpu.memory_space<semaphore_mem>>
    %3 = tpu.memref_squeeze %2 : memref<1x!tpu.dma_semaphore, #tpu.memory_space<semaphore_mem>> -> memref<!tpu.dma_semaphore, #tpu.memory_space<semaphore_mem>>
    tpu.enqueue_dma source(%0 : memref<2x8x32xf32, #tpu.memory_space<any>>) target(%1 : memref<2x8x32xf32, #tpu.memory_space<any>>) target_semaphore(%3 : memref<!tpu.dma_semaphore, #tpu.memory_space<semaphore_mem>>)
    %c0_i32_6 = arith.constant 0 : i32
    %c0_i32_7 = arith.constant 0 : i32
    %c0_i32_8 = arith.constant 0 : i32
    %c0_i32_9 = arith.constant 0 : i32
    %4 = tpu.memref_slice %arg0[%c0_i32_7, %c0_i32_8, %c0_i32_9] : memref<2x8x32xf32, #tpu.memory_space<any>> -> memref<2x8x32xf32, #tpu.memory_space<any>>
    %c0_i32_10 = arith.constant 0 : i32
    %c0_i32_11 = arith.constant 0 : i32
    %c0_i32_12 = arith.constant 0 : i32
    %5 = tpu.memref_slice %arg1[%c0_i32_10, %c0_i32_11, %c0_i32_12] : memref<2x8x32xf32, #tpu.memory_space<any>> -> memref<2x8x32xf32, #tpu.memory_space<any>>
    %6 = tpu.memref_slice %arg2[%c0_i32_6] : memref<1x!tpu.dma_semaphore, #tpu.memory_space<semaphore_mem>> -> memref<1x!tpu.dma_semaphore, #tpu.memory_space<semaphore_mem>>
    %7 = tpu.memref_squeeze %6 : memref<1x!tpu.dma_semaphore, #tpu.memory_space<semaphore_mem>> -> memref<!tpu.dma_semaphore, #tpu.memory_space<semaphore_mem>>
    tpu.wait_dma2 semaphore(%7 : memref<!tpu.dma_semaphore, #tpu.memory_space<semaphore_mem>>) src(%4 : memref<2x8x32xf32, #tpu.memory_space<any>>) dst(%5 : memref<2x8x32xf32, #tpu.memory_space<any>>)
    return
  }
}

</mosaic_0001>

<llo_original>
// kernel: tpu_custom_call.1
$region0: #{tpu_custom_call.1}
  #allocation0 [shape = 'u32[]', space=smem, size = 0x4, offset = 0x4, fixed_abs, tag = 'smem constant byte address 0x4 - core index']
  #allocation1 [shape = 'u32[144,128]{1,0:T(1,128)}', space=vmem, size = 0x12000, scoped, tag = 'internal scratch']
  #allocation2 [shape = 's32[1]{0}', space=sflag, size = 0x4, scoped, tag = 'scratch operand']
  #allocation3 [shape = 's32[]', space=sflag, size = 0x4, offset = 0, fixed_abs, tag = 'sflag constant byte address 0x0 - dummy sync flag']
  #allocation4 [shape = 'u32[0]{0}', space=smem, size = 0, offset = 0, fixed_abs, tag = 'smem constant byte address 0x0 - null']
  %s0 = inlined_call_operand.hbm [shape: f32[2,8,32], index: 0, kind: input, shape index: {}]
  %s1 = inlined_call_operand.hbm [shape: f32[2,8,32], index: 1, kind: output, shape index: {}]
  %s2 = sld [smem:[#allocation0]]
  $region2: #{tpu_custom_call.1} parent=0
    _
  %s4 = ssub.s32 1, %s2
  %s5 = scalar_select 0, %s4, %s2
  %s7 = sshll.u32 1, 14
  %s8 = sxor.u32 4294967295, %s7
  %s11 = sshll.u32 3, 24
  %s12 = sxor.u32 4294967295, %s11
  %s13 = sand.u32 0, %s12
  %s15 = sor.u32 %s13, 0
  %18 = dma.general %s0, 256, %s1, [#allocation2], [#allocation3], [#allocation4], %s15, 0
  %s19 = smul.u32 2, 8
  %s20 = smul.u32 %s19, 1
  %s21 = sshll.u32 %s20, 4
  %22 = dma.done [#allocation2], %s21
  %23 = vsyncmov [#allocation2]
  %s24 = vpop.sfrf %23
  %p25 = scmp.eq.s32.totalorder %s24, 0
  %p26 = pneg %p25
  %28 = shalt.err (%p26)

</llo_original>
